<compile_context>
chip_gen: v7x
topology: tpu7x:2x2x1
jax: 0.10.0
libtpu: 0.0.40
codegen_flags: <defaults>
</compile_context>

<pallas_src>
import jax
import jax.numpy as jnp
from jax import lax
from jax.experimental import pallas as pl
from jax.experimental.pallas import tpu as pltpu


def _linear_kernel(x_ref, w_ref, o_ref):
    # x_ref: (TILE_B, D) streamed tile; w_ref: (OUT, D) resident tile;
    # o_ref: (TILE_B, OUT).  Contract on D directly against w's original
    # (OUT, D) layout (equivalent to x @ w.T), f32 accumulation on the MXU.
    o_ref[...] = lax.dot_general(
        x_ref[...], w_ref[...],
        dimension_numbers=(((1,), (1,)), ((), ())),
        preferred_element_type=jnp.float32,
    ).astype(o_ref.dtype)


def _round_down(v, m):
    return (v // m) * m


def _round_up(v, m):
    return ((v + m - 1) // m) * m


def linear_no_bias(x, w, tile_b=None):
    """y = x @ w.T with x: (B, D), w: (OUT, D) -> (B, OUT)."""
    B, D = x.shape
    OUT, D2 = w.shape
    assert D == D2, "weight inner dim must match x inner dim"

    out_dtype = x.dtype
    itemsize = jnp.dtype(x.dtype).itemsize
    out_itemsize = jnp.dtype(out_dtype).itemsize
    # Sublane packing: 8 rows for 32-bit, 16 for bf16, 32 for int8/fp8.
    sublane = max(8, 32 // itemsize)

    # --- tile sizing: by bytes, not rows ------------------------------------
    # Per grid step the VMEM footprint is ~2x(x tile) + 2x(lane-padded out).
    # Target ~40 MiB total: fits comfortably on v7x (64 MiB physical) while
    # being large enough to amortize fixed per-step cost on v5e/v6e too.
    if tile_b is None:
        vmem_target = 40 * 1024 * 1024
        bytes_per_row = D * itemsize + 128 * out_itemsize  # x row + padded out row
        tile_b = (vmem_target // 2) // max(1, bytes_per_row)
        # Keep the grid at least ~4 steps so both v7x TensorCores get multiple
        # pipelined steps (prefetch i+1 / writeback i-1 stays alive).
        tile_b = min(tile_b, _round_up(max(1, pl.cdiv(B, 4)), sublane))
        tile_b = max(sublane, _round_down(tile_b, sublane))
    if B <= tile_b:
        tile_b = B  # single full block (exempt from tiling divisibility)
    else:
        assert tile_b % sublane == 0, (
            f"batch tile must be a multiple of {sublane} for dtype {x.dtype}")

    grid = (pl.cdiv(B, tile_b),)

    # --- VMEM limit with headroom (counts padded shapes) ---------------------
    x_buf = 2 * tile_b * D * itemsize                                   # x double-buffer
    w_buf = 2 * _round_up(OUT, sublane) * _round_up(D, 128) * itemsize  # resident W
    o_buf = 2 * tile_b * _round_up(OUT, 128) * out_itemsize             # lane-padded out
    vmem_need = x_buf + w_buf + o_buf
    vmem_limit = max(32 * 1024 * 1024,
                     min(48 * 1024 * 1024, int(vmem_need * 1.3)))

    cost = pl.CostEstimate(
        flops=2 * B * D * OUT,
        bytes_accessed=itemsize * (B * D + OUT * D) + out_itemsize * B * OUT,
        transcendentals=0,
    )

    return pl.pallas_call(
        _linear_kernel,
        out_shape=jax.ShapeDtypeStruct((B, OUT), out_dtype),
        grid_spec=pltpu.PrefetchScalarGridSpec(
            num_scalar_prefetch=0,
            grid=grid,
            in_specs=[
                # x streams over the batch dim (Pallas double-buffers the DMA).
                pl.BlockSpec((tile_b, D), lambda i: (i, 0)),
                # W in original (OUT, D) layout: constant block index ->
                # loaded once, resident; only sublane-pads to (8, D).
                pl.BlockSpec((OUT, D), lambda i: (0, 0)),
            ],
            # Output stays (tile_b, OUT=2); masked stores hide under x DMA.
            out_specs=pl.BlockSpec((tile_b, OUT), lambda i: (i, 0)),
        ),
        compiler_params=pltpu.CompilerParams(
            # Independent batch tiles -> shard across v7x's 2 TensorCores
            # (harmless no-op on single-TC v5e/v6e).
            dimension_semantics=("parallel",),
            vmem_limit_bytes=vmem_limit,
        ),
        cost_estimate=cost,
    )(x, w)


if __name__ == "__main__":
    key = jax.random.PRNGKey(0)
    kx, kw = jax.random.split(key)

    # Small shapes consistent with the module (nn.Linear(input_dims, 2)).
    batch = 256
    input_dims = 128
    out_features = 2

    x = jax.random.normal(kx, (batch, input_dims), dtype=jnp.float32)
    # Deterministic weight init (nn.Linear weight shape: (out, in)).
    bound = 1.0 / (input_dims ** 0.5)
    w = jax.random.uniform(
        kw, (out_features, input_dims), dtype=jnp.float32,
        minval=-bound, maxval=bound,
    )

    y_ref = x @ w.T

    # 1) Auto tile sizing (grid length ~4 at this B).
    y = linear_no_bias(x, w)
    jax.block_until_ready(y)
    assert y.shape == (batch, out_features)
    assert jnp.allclose(y, y_ref, atol=1e-5, rtol=1e-5)

    # 2) Explicit small tile to exercise a longer pipelined batch grid.
    y2 = linear_no_bias(x, w, tile_b=64)
    jax.block_until_ready(y2)
    assert jnp.allclose(y2, y_ref, atol=1e-5, rtol=1e-5)

    print("KERNEL_OK")
</pallas_src>

<mosaic_0001>
module attributes {stable_mosaic.version = 11 : i64} {
  func.func @_linear_kernel(%arg0: i32, %arg1: memref<64x128xf32, #tpu.memory_space<vmem>>, %arg2: memref<2x128xf32, #tpu.memory_space<vmem>>, %arg3: memref<64x2xf32, #tpu.memory_space<vmem>>) attributes {dimension_semantics = [#tpu.dimension_semantics<parallel>], iteration_bounds = array<i64: 4>, scalar_prefetch = 0 : i64, scratch_operands = 0 : i64, tpu.core_type = #tpu.core_type<tc>, window_params = [{transform_indices = @transform_0, window_bounds = array<i64: 64, 128>}, {pipeline_mode = #tpu.pipeline_mode<synchronous>, transform_indices = @transform_1, window_bounds = array<i64: 2, 128>}, {transform_indices = @transform_2, window_bounds = array<i64: 64, 2>}]} {
    %c0 = arith.constant 0 : index
    %c0_0 = arith.constant 0 : index
    %0 = vector.load %arg1[%c0, %c0_0] : memref<64x128xf32, #tpu.memory_space<vmem>>, vector<64x128xf32>
    %c0_1 = arith.constant 0 : index
    %c0_2 = arith.constant 0 : index
    %1 = vector.load %arg2[%c0_1, %c0_2] : memref<2x128xf32, #tpu.memory_space<vmem>>, vector<2x128xf32>
    %cst = arith.constant dense<0.000000e+00> : vector<64x2xf32>
    %2 = tpu.matmul %0, %1, %cst {dimension_numbers = #tpu.dot_dimension_numbers<[1], [1], [0], [0], [0, 0, 1, 0], [], []>} : vector<64x128xf32>, vector<2x128xf32>, vector<64x2xf32> -> vector<64x2xf32>
    %c0_3 = arith.constant 0 : index
    %c0_4 = arith.constant 0 : index
    %3 = vector.load %arg3[%c0_3, %c0_4] : memref<64x2xf32, #tpu.memory_space<vmem>>, vector<64x2xf32>
    tpu.vector_store %arg3[%c0_3, %c0_4], %2 {strides = array<i32>} : memref<64x2xf32, #tpu.memory_space<vmem>>, vector<64x2xf32>,
    return
  }
  func.func @transform_0(%arg0: i32) -> (i32, i32) {
    %c0_i32 = arith.constant 0 : i32
    %c0_i32_0 = arith.constant 0 : i32
    return %arg0, %c0_i32 : i32, i32
  }
  func.func @transform_1(%arg0: i32) -> (i32, i32) {
    %c0_i32 = arith.constant 0 : i32
    %c0_i32_0 = arith.constant 0 : i32
    %c0_i32_1 = arith.constant 0 : i32
    return %c0_i32, %c0_i32_0 : i32, i32
  }
  func.func @transform_2(%arg0: i32) -> (i32, i32) {
    %c0_i32 = arith.constant 0 : i32
    %c0_i32_0 = arith.constant 0 : i32
    return %arg0, %c0_i32 : i32, i32
  }
}

</mosaic_0001>

<llo_original>
// kernel: tpu_custom_call.1
$region0: #{tpu_custom_call.1}
  #allocation0 [shape = 'u32[]', space=smem, size = 0x4, offset = 0x4, fixed_abs, tag = 'smem constant byte address 0x4 - core index']
  #allocation1 [shape = 'u32[144,128]{1,0:T(1,128)}', space=vmem, size = 0x12000, scoped, tag = 'internal scratch']
  %s0 = inlined_call_operand.hbm [shape: f32[256,128], index: 0, kind: input, shape index: {}]
  %s1 = inlined_call_operand.vmem [shape: f32[2,128], index: 1, kind: input, shape index: {}]
  %s2 = inlined_call_operand.vmem [shape: f32[256,2], index: 2, kind: output, shape index: {}]
  %s3 = sld [smem:[#allocation0]]
  $region45: #{tpu_custom_call.1} parent=0
    _
  %s5 = ssub.s32 1, %s3
  %s6 = scalar_select 0, %s5, %s3
  $region1: #{tpu_custom_call.1} parent=0
    #allocation2 [shape = 'u8[65536]{0}', space=vmem, size = 0x10000, scoped, tag = 'input window, operand 0']
    #allocation3 [shape = 's32[2]{0}', space=sflag, size = 0x8, scoped, tag = 'scoped memory for tpu_custom_call.1']
    %7 = vsyncpa [#allocation3], 0
    %s8 = scalar_lea.sflag [#allocation3], 1
    %9 = vsyncpa %s8, 0
    loop: start=0, step=1, limit=6
    $region2: #{tpu_custom_call.1} parent=1 // loop_pre_header
      _
    $region3: #{tpu_custom_call.1} parent=1 // loop_header
      %s11 = sphi 0, %s15
      %p12 = scmp.ge.s32.totalorder %s11, 6
      %s21 = sphi 0, %s23
      %s24 = sphi 0, %s21
      %s25 = sphi 0, %s24
      %s41 = sphi 0, %s25
      %s45 = sphi 0, %s45
      %s47 = sphi 0, %s45
      %s48 = sphi 0, %s47
      %s62 = sphi 0, %s48
      %s68 = sphi 0, %s70
      %s71 = sphi 0, %s68
      %s72 = sphi 0, %s71
      %s88 = sphi 0, %s72
    $region4: #{tpu_custom_call.1} parent=1 // loop_header_branch
      %14 = sbr.rel (%p12) target = $region8
    $region5: #{tpu_custom_call.1} parent=1 // loop_body
      %s16 = ssub.s32 %s11, 1
      %s17 = ssub.s32 %s11, 2
      %s18 = sadd.s32 %s11, 1
      %s19 = ssub.s32 %s11, %s18
      %p20 = scmp.eq.s32.totalorder %s19, 0
      %s22 = sadd.s32 %s21, 1
      %s23 = scalar_select %p20, %s21, %s22
      %p26 = pneg %p20
      %p27 = scmp.eq.s32.totalorder %s11, 3
      %p28 = por %p26, %p27
      %p29 = scmp.ne.s32.totalorder %s21, %s24
      %p30 = scmp.eq.s32.totalorder %s11, 0
      %p31 = por %p29, %p30
      %p32 = scmp.ne.s32.totalorder %s21, %s24
      %p33 = scmp.eq.s32.totalorder %s16, 3
      %p34 = por %p32, %p33
      %p35 = scmp.ne.s32.totalorder %s24, %s25
      %p36 = scmp.eq.s32.totalorder %s16, 0
      %p37 = por %p35, %p36
      %p38 = scmp.ne.s32.totalorder %s24, %s25
      %p39 = scmp.eq.s32.totalorder %s17, 3
      %p40 = por %p38, %p39
      %p42 = scmp.ne.s32.totalorder %s25, %s41
      %p43 = scmp.eq.s32.totalorder %s17, 0
      %p44 = por %p42, %p43
      %s46 = sadd.s32 %s45, 1
      %p49 = scmp.eq.s32.totalorder %s11, 3
      %p50 = scmp.ne.s32.totalorder %s45, %s47
      %p51 = scmp.eq.s32.totalorder %s11, 0
      %p52 = por %p50, %p51
      %p53 = scmp.ne.s32.totalorder %s45, %s47
      %p54 = scmp.eq.s32.totalorder %s16, 3
      %p55 = por %p53, %p54
      %p56 = scmp.ne.s32.totalorder %s47, %s48
      %p57 = scmp.eq.s32.totalorder %s16, 0
      %p58 = por %p56, %p57
      %p59 = scmp.ne.s32.totalorder %s47, %s48
      %p60 = scmp.eq.s32.totalorder %s17, 3
      %p61 = por %p59, %p60
      %p63 = scmp.ne.s32.totalorder %s48, %s62
      %p64 = scmp.eq.s32.totalorder %s17, 0
      %p65 = por %p63, %p64
      %s66 = ssub.s32 %s11, %s18
      %p67 = scmp.eq.s32.totalorder %s66, 0
      %s69 = sadd.s32 %s68, 1
      %s70 = scalar_select %p67, %s68, %s69
      %p73 = pneg %p67
      %p74 = scmp.eq.s32.totalorder %s11, 3
      %p75 = por %p73, %p74
      %p76 = scmp.ne.s32.totalorder %s68, %s71
      %p77 = scmp.eq.s32.totalorder %s11, 0
      %p78 = por %p76, %p77
      %p79 = scmp.ne.s32.totalorder %s68, %s71
      %p80 = scmp.eq.s32.totalorder %s16, 3
      %p81 = por %p79, %p80
      %p82 = scmp.ne.s32.totalorder %s71, %s72
      %p83 = scmp.eq.s32.totalorder %s16, 0
      %p84 = por %p82, %p83
      %p85 = scmp.ne.s32.totalorder %s71, %s72
      %p86 = scmp.eq.s32.totalorder %s17, 3
      %p87 = por %p85, %p86
      %p89 = scmp.ne.s32.totalorder %s72, %s88
      %p90 = scmp.eq.s32.totalorder %s17, 0
      %p91 = por %p89, %p90
      %p92 = scmp.le.s32.totalorder 1, %s11
      %p93 = scmp.lt.s32.totalorder %s11, 5
      %p94 = pnand %p92, %p93
      %p95 = pneg %p94
      // Predicated region
      $region9: #{tpu_custom_call.1} parent=5 // pred_check
        _
      $region10: #{tpu_custom_call.1} parent=5 // pred_check_branch
        %97 = sbr.rel (%p94) target = $region12
      $region11: #{tpu_custom_call.1} parent=5 // pred_region
        %s98 = ssub.s32 %s11, 1
        // Predicated region
        $region13: #{tpu_custom_call.1} parent=11 // pred_check
          %p99 = pneg %p58
        $region14: #{tpu_custom_call.1} parent=11 // pred_check_branch
          %101 = sbr.rel (%p99) target = $region16
        $region15: #{tpu_custom_call.1} parent=11 // pred_region
          _
        $region16: #{tpu_custom_call.1} parent=11 // pred_fallthru
          _
      $region12: #{tpu_custom_call.1} parent=5 // pred_fallthru
        _
      %p102 = scmp.lt.s32.totalorder %s11, 4
      // Predicated region
      $region17: #{tpu_custom_call.1} parent=5 // pred_check
        %p103 = pneg %p102
      $region18: #{tpu_custom_call.1} parent=5 // pred_check_branch
        %105 = sbr.rel (%p103) target = $region20
      $region19: #{tpu_custom_call.1} parent=5 // pred_region
        // Predicated region
        $region21: #{tpu_custom_call.1} parent=19 // pred_check
          %p106 = pneg %p31
        $region22: #{tpu_custom_call.1} parent=19 // pred_check_branch
          %108 = sbr.rel (%p106) target = $region24
        $region23: #{tpu_custom_call.1} parent=19 // pred_region
          %s109 = sand.u32 %s21, 1
          %s110 = scalar_lea.sflag [#allocation3], %s109
          %s111 = sand.u32 %s21, 1
          %s112 = smul.addr %s111, 64
          %s113 = scalar_lea.vmem [#allocation2], %s112
          %s114 = smul.u32 8, %s11
          %s116 = ssub.s32 1024, 1024
          %117 = vsyncadd %s110, %s116
          %s118 = smul.addr %s114, 128
          %s119 = scalar_lea.hbm %s0, %s118
          %s120 = sshll.u32 %s113, 4
          %s121 = int_to_ptr.vmem [resolvable:$true] %s120
          %126 = dma.hbm_to_vmem [thread:$0]  %s119, 1024, %s121, %s110, 128, 128, 8
        $region24: #{tpu_custom_call.1} parent=19 // pred_fallthru
          _
      $region20: #{tpu_custom_call.1} parent=5 // pred_fallthru
        _
      %p127 = scmp.le.s32.totalorder 1, %s11
      %p128 = scmp.lt.s32.totalorder %s11, 5
      %p129 = pnand %p127, %p128
      %p130 = pneg %p129
      // Predicated region
      $region25: #{tpu_custom_call.1} parent=5 // pred_check
        _
      $region26: #{tpu_custom_call.1} parent=5 // pred_check_branch
        %132 = sbr.rel (%p129) target = $region28
      $region27: #{tpu_custom_call.1} parent=5 // pred_region
        %s133 = ssub.s32 %s11, 1
        %s134 = sand.u32 %s24, 1
        %s135 = scalar_lea.sflag [#allocation3], %s134
        %s136 = sand.u32 %s24, 1
        %s137 = smul.addr %s136, 64
        %s138 = scalar_lea.vmem [#allocation2], %s137
        // Predicated region
        $region29: #{tpu_custom_call.1} parent=27 // pred_check
          %p139 = pneg %p37
        $region30: #{tpu_custom_call.1} parent=27 // pred_check_branch
          %141 = sbr.rel (%p139) target = $region32
        $region31: #{tpu_custom_call.1} parent=27 // pred_region
          %142 = dma.done %s135, 1024
        $region32: #{tpu_custom_call.1} parent=27 // pred_fallthru
          _
        %s143 = sand.u32 %s24, 1
        %s144 = scalar_lea.sflag [#allocation3], %s143
        %s145 = sand.u32 %s24, 1
        %s146 = smul.addr %s145, 64
        %s147 = scalar_lea.vmem [#allocation2], %s146
        %p148 = pneg %p37
        %p149 = pneg %p34
        %p150 = pneg %p58
        %p151 = pneg %p55
        %p152 = pneg %p84
        %p153 = pneg %p81
        %s154 = smul.u32 8, %s16
        %p155 = scmp.lt.s32.totalorder %s154, 31
        %s156 = scalar_select %p155, %s154, 31
        %s157 = smul.addr %s156, 8
        %s158 = scalar_lea.vmem %s2, %s157
        %s159 = smul.u32 8, %s16
        %s160 = smul.u32 8, %s16
        %p161 = scmp.lt.s32.totalorder %s160, 31
        %s162 = scalar_select %p161, %s160, 31
        %s163 = smul.addr %s162, 8
        %s164 = scalar_lea.vmem %s2, %s163
        %s165 = smul.u32 8, %s16
        %v166 = vld [vmem:[%s138] sm:$0xff]
        %v167 = vld [vmem:[%s138 + $0x8] sm:$0xff]
        %v168 = vld [vmem:[%s138 + $0x10] sm:$0xff]
        %v169 = vld [vmem:[%s138 + $0x18] sm:$0xff]
        %v170 = vld [vmem:[%s138 + $0x20] sm:$0xff]
        %v171 = vld [vmem:[%s138 + $0x28] sm:$0xff]
        %v172 = vld [vmem:[%s138 + $0x30] sm:$0xff]
        %v173 = vld [vmem:[%s138 + $0x38] sm:$0xff]
        %v174 = vld [vmem:[%s1] sm:$0x3]
        %175 = vmatprep.subr.mxu0 0.0
        %176 = vmatpush1.xpose.msra.mxu0 %v174
        %177 = vmatprep.subr.mxu0 0.0
        %178 = vmatpush1.xpose.msra.mxu0 0.0
        %179 = vmatprep.subr.mxu0 0.0
        %180 = vmatpush1.xpose.msra.mxu0 0.0
        %181 = vmatprep.subr.mxu0 0.0
        %182 = vmatpush1.xpose.msra.mxu0 0.0
        %183 = vmatprep.subr.mxu0 0.0
        %184 = vmatpush1.xpose.msra.mxu0 0.0
        %185 = vmatprep.subr.mxu0 0.0
        %186 = vmatpush1.xpose.msra.mxu0 0.0
        %187 = vmatprep.subr.mxu0 0.0
        %188 = vmatpush1.xpose.msra.mxu0 0.0
        %189 = vmatprep.subr.mxu0 0.0
        %190 = vmatpush1.xpose.msra.mxu0 0.0
        %191 = vmatprep.subr.mxu0 0.0
        %192 = vmatpush1.xpose.msra.mxu0 0.0
        %193 = vmatprep.subr.mxu0 0.0
        %194 = vmatpush1.xpose.msra.mxu0 0.0
        %195 = vmatprep.subr.mxu0 0.0
        %196 = vmatpush1.xpose.msra.mxu0 0.0
        %197 = vmatprep.subr.mxu0 0.0
        %198 = vmatpush1.xpose.msra.mxu0 0.0
        %199 = vmatprep.subr.mxu0 0.0
        %200 = vmatpush1.xpose.msra.mxu0 0.0
        %201 = vmatprep.subr.mxu0 0.0
        %202 = vmatpush1.xpose.msra.mxu0 0.0
        %203 = vmatprep.subr.mxu0 0.0
        %204 = vmatpush1.xpose.msra.mxu0 0.0
        %205 = vmatprep.subr.mxu0 0.0
        %206 = vmatpush1.xpose.msra.mxu0 0.0
        %207 = vmatprep.subr.mxu0 0.0
        %208 = vmatpush1.xpose.msra.mxu0 0.0
        %209 = vmatprep.subr.mxu0 0.0
        %210 = vmatpush1.xpose.msra.mxu0 0.0
        %211 = vmatprep.subr.mxu0 0.0
        %212 = vmatpush1.xpose.msra.mxu0 0.0
        %213 = vmatprep.subr.mxu0 0.0
        %214 = vmatpush1.xpose.msra.mxu0 0.0
        %215 = vmatprep.subr.mxu0 0.0
        %216 = vmatpush1.xpose.msra.mxu0 0.0
        %217 = vmatprep.subr.mxu0 0.0
        %218 = vmatpush1.xpose.msra.mxu0 0.0
        %219 = vmatprep.subr.mxu0 0.0
        %220 = vmatpush1.xpose.msra.mxu0 0.0
        %221 = vmatprep.subr.mxu0 0.0
        %222 = vmatpush1.xpose.msra.mxu0 0.0
        %223 = vmatprep.subr.mxu0 0.0
        %224 = vmatpush1.xpose.msra.mxu0 0.0
        %225 = vmatprep.subr.mxu0 0.0
        %226 = vmatpush1.xpose.msra.mxu0 0.0
        %227 = vmatprep.subr.mxu0 0.0
        %228 = vmatpush1.xpose.msra.mxu0 0.0
        %229 = vmatprep.subr.mxu0 0.0
        %230 = vmatpush1.xpose.msra.mxu0 0.0
        %231 = vmatprep.subr.mxu0 0.0
        %232 = vmatpush1.xpose.msra.mxu0 0.0
        %233 = vmatprep.subr.mxu0 0.0
        %234 = vmatpush1.xpose.msra.mxu0 0.0
        %235 = vmatprep.subr.mxu0 0.0
        %236 = vmatpush1.xpose.msra.mxu0 0.0
        %237 = vmatprep.subr.mxu0 0.0
        %238 = vmatpush1.xpose.msra.mxu0 0.0
        %239 = vmatprep.mubr.f32.mxu0 0.0
        %240 = vmatmul.mubr.f32.gmra.mrb[0].mxu0 %v166
        %v241 = vpop.f32.mrb[0].mxu0
        %v242 = vadd.f32 0.0, %v241
        %v243 = vpop.f32.mrb[0].mxu0
        %244 = vmatprep.mubr.f32.mxu0 0.0
        %245 = vmatmul.mubr.f32.gmra.mrb[0].mxu0 %v167
        %v246 = vpop.f32.mrb[0].mxu0
        %v247 = vadd.f32 0.0, %v246
        %v248 = vpop.f32.mrb[0].mxu0
        %249 = vmatprep.mubr.f32.mxu0 0.0
        %250 = vmatmul.mubr.f32.gmra.mrb[0].mxu0 %v168
        %v251 = vpop.f32.mrb[0].mxu0
        %v252 = vadd.f32 0.0, %v251
        %v253 = vpop.f32.mrb[0].mxu0
        %254 = vmatprep.mubr.f32.mxu0 0.0
        %255 = vmatmul.mubr.f32.gmra.mrb[0].mxu0 %v169
        %v256 = vpop.f32.mrb[0].mxu0
        %v257 = vadd.f32 0.0, %v256
        %v258 = vpop.f32.mrb[0].mxu0
        %259 = vmatprep.mubr.f32.mxu0 0.0
        %260 = vmatmul.mubr.f32.gmra.mrb[0].mxu0 %v170
        %v261 = vpop.f32.mrb[0].mxu0
        %v262 = vadd.f32 0.0, %v261
        %v263 = vpop.f32.mrb[0].mxu0
        %264 = vmatprep.mubr.f32.mxu0 0.0
        %265 = vmatmul.mubr.f32.gmra.mrb[0].mxu0 %v171
        %v266 = vpop.f32.mrb[0].mxu0
        %v267 = vadd.f32 0.0, %v266
        %v268 = vpop.f32.mrb[0].mxu0
        %269 = vmatprep.mubr.f32.mxu0 0.0
        %270 = vmatmul.mubr.f32.gmra.mrb[0].mxu0 %v172
        %v271 = vpop.f32.mrb[0].mxu0
        %v272 = vadd.f32 0.0, %v271
        %v273 = vpop.f32.mrb[0].mxu0
        %274 = vmatprep.mubr.f32.mxu0 0.0
        %275 = vmatmul.mubr.f32.gmra.mrb[0].mxu0 %v173
        %v276 = vpop.f32.mrb[0].mxu0
        %v277 = vadd.f32 0.0, %v276
        %v278 = vpop.f32.mrb[0].mxu0
        %279 = vdwg.mxu0
        %vm280 = vcmask 15360
        %281 = vst.msk [vmem:[%s164] sm:$0xff] %vm280, %v242
        %282 = vst.msk [vmem:[%s164 + $0x8] sm:$0xff] %vm280, %v247
        %283 = vst.msk [vmem:[%s164 + $0x10] sm:$0xff] %vm280, %v252
        %284 = vst.msk [vmem:[%s164 + $0x18] sm:$0xff] %vm280, %v257
        %285 = vst.msk [vmem:[%s164 + $0x20] sm:$0xff] %vm280, %v262
        %286 = vst.msk [vmem:[%s164 + $0x28] sm:$0xff] %vm280, %v267
        %287 = vst.msk [vmem:[%s164 + $0x30] sm:$0xff] %vm280, %v272
        %288 = vst.msk [vmem:[%s164 + $0x38] sm:$0xff] %vm280, %v277
        %s289 = smul.u32 8, %s16
        %p290 = scmp.lt.s32.totalorder %s289, 31
        %s291 = scalar_select %p290, %s289, 31
        %s292 = smul.addr %s291, 8
        %s293 = scalar_lea.vmem %s2, %s292
        // Predicated region
        $region33: #{tpu_custom_call.1} parent=27 // pred_check
          %p294 = pneg %p81
        $region34: #{tpu_custom_call.1} parent=27 // pred_check_branch
          %296 = sbr.rel (%p294) target = $region36
        $region35: #{tpu_custom_call.1} parent=27 // pred_region
          %s297 = smul.u32 8, %s16
        $region36: #{tpu_custom_call.1} parent=27 // pred_fallthru
          _
      $region28: #{tpu_custom_call.1} parent=5 // pred_fallthru
        _
      %p298 = scmp.le.s32.totalorder 2, %s11
      // Predicated region
      $region37: #{tpu_custom_call.1} parent=5 // pred_check
        %p299 = pneg %p298
      $region38: #{tpu_custom_call.1} parent=5 // pred_check_branch
        %301 = sbr.rel (%p299) target = $region40
      $region39: #{tpu_custom_call.1} parent=5 // pred_region
        %s302 = ssub.s32 %s11, 2
        // Predicated region
        $region41: #{tpu_custom_call.1} parent=39 // pred_check
          %p303 = pneg %p87
        $region42: #{tpu_custom_call.1} parent=39 // pred_check_branch
          %305 = sbr.rel (%p303) target = $region44
        $region43: #{tpu_custom_call.1} parent=39 // pred_region
          %s306 = smul.u32 8, %s17
          %p307 = scmp.lt.s32.totalorder %s306, 31
          %s308 = scalar_select %p307, %s306, 31
          %s309 = smul.addr %s308, 8
          %s310 = scalar_lea.vmem %s2, %s309
        $region44: #{tpu_custom_call.1} parent=39 // pred_fallthru
          _
      $region40: #{tpu_custom_call.1} parent=5 // pred_fallthru
        _
    $region6: #{tpu_custom_call.1} parent=1 // loop_footer
      %s15 = sadd.s32 1, %s11
    $region7: #{tpu_custom_call.1} parent=1 // loop_footer_branch
      %10 = sbr.rel target = $region3
    $region8: #{tpu_custom_call.1} parent=1 // loop_exit
      _
    %311 = vsyncpa [#allocation3], 1
    %s312 = scalar_lea.sflag [#allocation3], 1
    %313 = vsyncpa %s312, 1

</llo_original>
